<compile_context>
chip_gen: v7x
topology: tpu7x:2x2x1
jax: 0.10.0
libtpu: 0.0.40
codegen_flags: <defaults>
</compile_context>

<pallas_src>
import math

import jax
import jax.numpy as jnp
from jax.experimental import pallas as pl
from jax.experimental.pallas import tpu as pltpu


# ---------------------------------------------------------------------------
# Kernel body
# ---------------------------------------------------------------------------

def _make_kernel(eb, precision):
    """Build the kernel for one grid step: Eb members x Ib inputs x To outputs."""

    def kernel(x_ref, k_ref, b_ref, o_ref, acc_ref):
        # Block shapes:
        #   x_ref  : (Eb, Ib)       activations
        #   k_ref  : (Eb, Ib, To)   weights in [E, I, O] layout (contraction on
        #                           the sublane axis -> no MXU-feed transpose)
        #   b_ref  : (Eb, To)       bias
        #   o_ref  : (Eb, To)       output (dense (8,128)-aligned stores)
        #   acc_ref: (Eb, To) f32   accumulator across the I grid axis
        ki = pl.program_id(2)

        @pl.when(ki == 0)
        def _init():
            acc_ref[...] = jnp.zeros_like(acc_ref)

        # Per-ensemble-member matvec on the MXU. Eb is a small trace-time
        # constant, so a static unroll keeps everything as plain 2-D dots
        # (guaranteed lowering, f32 accumulation).
        for e in range(eb):
            xe = x_ref[pl.ds(e, 1), :]                      # (1, Ib)
            ke = k_ref[e]                                   # (Ib, To)
            acc_ref[pl.ds(e, 1), :] += jnp.dot(
                xe, ke, preferred_element_type=jnp.float32, precision=precision)

        @pl.when(ki == pl.num_programs(2) - 1)
        def _finalize():
            o_ref[...] = (acc_ref[...] + b_ref[...].astype(jnp.float32)
                          ).astype(o_ref.dtype)

    return kernel


# ---------------------------------------------------------------------------
# Tile selection (generation-aware)
# ---------------------------------------------------------------------------

def _tpu_vmem_capacity_bytes():
    """Physical VMEM of the local chip; conservative fallback if unknown."""
    try:
        info = pltpu.get_tpu_info()
        cap = getattr(info, "vmem_capacity_bytes", None)
        if cap:
            return int(cap)
    except Exception:
        pass
    return 64 << 20  # conservative: v7x per-TensorCore VMEM


def _divisors_desc(n):
    return [d for d in range(n, 0, -1) if n % d == 0]


def _lane_tile_candidates(n):
    """Tiles for a lane (last) block dim: full extent, or multiples of 128."""
    cands = [n] + [d for d in _divisors_desc(n) if d % 128 == 0 and d != n]
    seen, out = set(), []
    for d in cands:
        if d not in seen:
            seen.add(d)
            out.append(d)
    return out
    # TODO(synk): pad O/I up to a multiple of 128 instead of falling back to the
    # full extent when no /128 divisor exists (avoids masked partial stores).


def _member_tile_candidates(e, cap):
    """Ensemble-block sizes: divisors of E that are %8 (sublane) or == E."""
    cands = [d for d in _divisors_desc(e) if (d % 8 == 0 or d == e) and d <= cap]
    return cands if cands else [e]


def _pick_tiles(E, O, I, itemsize, budget, *, max_members_per_block=32):
    """Pick (Eb, Ib, To) maximizing the weight slab under `budget` while keeping
    an even, >=4 total grid step count when the problem allows (2+ steps per
    v7x TensorCore) and preferring contiguous (large-To) weight DMAs."""
    eb_cands = _member_tile_candidates(E, max_members_per_block)
    ib_cands = _lane_tile_candidates(I)
    to_cands = _lane_tile_candidates(O)

    def steps(eb, ib, to):
        return (E // eb) * (O // to) * (I // ib)

    def parallel_score(s):
        if s >= 4 and s % 2 == 0:
            return 2
        if s >= 2:
            return 1
        return 0

    combos = [(eb, ib, to) for eb in eb_cands for ib in ib_cands for to in to_cands]
    fitting = [c for c in combos if c[0] * c[1] * c[2] * itemsize <= budget]
    if fitting:
        def key(c):
            eb, ib, to = c
            return (parallel_score(steps(eb, ib, to)),  # keep both v7x TCs busy
                    eb * ib * to,                        # biggest slab under budget
                    to,                                  # contiguous weight DMA rows
                    ib,                                  # fewer reduction passes
                    eb)
        return max(fitting, key=key)
    # Nothing fits the budget: take the smallest legal block and let the
    # (larger) vmem_limit absorb it.
    return min(combos, key=lambda c: c[0] * c[1] * c[2])


# ---------------------------------------------------------------------------
# Public API
# ---------------------------------------------------------------------------

def prepare_named_linear_params(kernel_eoi, bias, *, stream_dtype=None):
    """One-time conversion of torch-layout parameters for the Pallas kernel.

    * Transposes kernel [E, O, I] -> [E, I, O] so the contraction dim lands on
      the sublane axis of every weight tile (no per-step transpose feeding the
      MXU).
    * Optionally casts the weights ONCE to a narrower HBM-stream dtype (e.g.
      jnp.bfloat16) -- do this at parameter-store time, not per call, so the
      per-call HBM traffic is exactly one pass over the (narrow) weights.
      Accumulation inside the kernel stays f32 either way.
    """
    kernel_eio = jnp.swapaxes(kernel_eoi, -1, -2)
    if stream_dtype is not None:
        kernel_eio = kernel_eio.astype(stream_dtype)
    return kernel_eio, bias


def named_linear(x, kernel, bias, *, kernel_layout="eio", out_dtype=None,
                 weight_block_budget_bytes=None, max_members_per_block=32,
                 weight_buffer_count=2, precision=None):
    """Pallas implementation of NamedLinear.forward.

    x:      [*batch, I]   (prod(batch) must equal E, the ensemble case the
                           torch module's broadcasting relies on end-to-end)
    kernel: [E, I, O] if kernel_layout == "eio" (preferred; see
            prepare_named_linear_params), or torch-layout [E, O, I] if
            kernel_layout == "eoi" (transposed here, costing an extra HBM pass
            over the weights per call).
    bias:   [E, O]
    returns [*batch, O]
    """
    if kernel_layout == "eoi":
        kernel = jnp.swapaxes(kernel, -1, -2)   # per-call cost; prefer "eio"
    elif kernel_layout != "eio":
        raise ValueError(f"unknown kernel_layout {kernel_layout!r}")

    E, I, O = kernel.shape
    if bias.shape != (E, O):
        raise ValueError(f"bias shape {bias.shape} != {(E, O)}")
    if x.shape[-1] != I:
        raise ValueError(f"x last dim {x.shape[-1]} != input size {I}")

    batch_shape = x.shape[:-1]
    if out_dtype is None:
        out_dtype = x.dtype

    x2 = x.reshape(-1, I)
    if x2.shape[0] != E:
        # TODO(synk): torch also broadcasts an E == 1 kernel over the batch;
        # only the Bflat == E ensemble case used by the library is implemented.
        raise ValueError(
            f"flattened batch {x2.shape[0]} must equal ensemble size {E}")
    if x2.dtype != kernel.dtype:
        x2 = x2.astype(kernel.dtype)            # x is tiny; weights set the stream dtype

    vmem_cap = _tpu_vmem_capacity_bytes()
    if weight_block_budget_bytes is None:
        # ~16 MiB weight slabs on 128-MiB-VMEM chips (v5e/v6e), ~8 MiB on v7x.
        weight_block_budget_bytes = max(vmem_cap // 8, 4 << 20)

    itemsize = jnp.dtype(kernel.dtype).itemsize
    Eb, Ib, To = _pick_tiles(E, O, I, itemsize, weight_block_budget_bytes,
                             max_members_per_block=max_members_per_block)
    grid = (E // Eb, O // To, I // Ib)

    # VMEM budget: multi-buffered input/output blocks + accumulator + headroom,
    # never below the 32 MiB scoped default, capped at ~3/4 of physical VMEM
    # (96 MiB on v5e/v6e, 48 MiB on v7x).
    nbuf_w = max(2, weight_buffer_count)
    wbytes = Eb * Ib * To * itemsize
    xbytes = Eb * Ib * jnp.dtype(x2.dtype).itemsize
    bbytes = Eb * To * jnp.dtype(bias.dtype).itemsize
    obytes = Eb * To * jnp.dtype(out_dtype).itemsize
    need = nbuf_w * wbytes + 2 * (xbytes + bbytes + obytes) + Eb * To * 4 + (8 << 20)
    vmem_limit = int(min(max(need, 32 << 20), (vmem_cap * 3) // 4))
    if need > vmem_limit:
        vmem_limit = int(min(need, vmem_cap))

    w_spec_kwargs = {}
    if weight_buffer_count > 2:
        # Extra weight buffering hides DMA-issue latency of short blocks (v7x).
        w_spec_kwargs["pipeline_mode"] = pl.Buffered(weight_buffer_count)

    bytes_accessed = (E * I * O * itemsize
                      + (O // To) * E * I * jnp.dtype(x2.dtype).itemsize
                      + E * O * (jnp.dtype(bias.dtype).itemsize
                                 + jnp.dtype(out_dtype).itemsize))

    out = pl.pallas_call(
        _make_kernel(Eb, precision),
        out_shape=jax.ShapeDtypeStruct((E, O), out_dtype),
        grid_spec=pltpu.PrefetchScalarGridSpec(
            num_scalar_prefetch=0,
            grid=grid,
            in_specs=[
                pl.BlockSpec((Eb, Ib), lambda e, o, k: (e, k)),
                pl.BlockSpec((Eb, Ib, To), lambda e, o, k: (e, k, o),
                             **w_spec_kwargs),
                pl.BlockSpec((Eb, To), lambda e, o, k: (e, o)),
            ],
            out_specs=pl.BlockSpec((Eb, To), lambda e, o, k: (e, o)),
            scratch_shapes=[pltpu.VMEM((Eb, To), jnp.float32)],
        ),
        compiler_params=pltpu.CompilerParams(
            dimension_semantics=("parallel", "parallel", "arbitrary"),
            vmem_limit_bytes=vmem_limit,
        ),
        cost_estimate=pl.CostEstimate(
            flops=2 * E * O * I,
            transcendentals=0,
            bytes_accessed=int(bytes_accessed),
        ),
    )(x2, kernel, bias)

    return out.reshape(*batch_shape, O)


# ---------------------------------------------------------------------------
# Demo / self-test
# ---------------------------------------------------------------------------

if __name__ == "__main__":
    # Module configuration: input_shape=[I], output_shape=[O], ensemble_shapes=[E]
    batch_shape = (2, 4)        # flattens to Bflat = 8 == E
    E, I, O = 8, 128, 128

    key = jax.random.PRNGKey(0)
    kkey, xkey = jax.random.split(key)

    # Deterministic parameter init mirroring torch:
    #   kernel = kaiming_uniform_(zeros([E, O, I]), a=sqrt(5))
    #     -> fan_in = O * I, bound = 1/sqrt(fan_in), U(-bound, bound)
    #   bias   = zeros([E, O])
    fan_in = O * I
    bound = 1.0 / math.sqrt(fan_in)
    kernel_eoi = jax.random.uniform(kkey, (E, O, I), jnp.float32,
                                    minval=-bound, maxval=bound)
    bias = jnp.zeros((E, O), jnp.float32)

    x = jax.random.normal(xkey, (*batch_shape, I), dtype=jnp.float32)

    # One-time parameter preparation ([E, O, I] -> [E, I, O]); per-call weight
    # traffic is then exactly one HBM pass over the kernel.
    kernel_eio, bias_p = prepare_named_linear_params(kernel_eoi, bias)

    y = named_linear(x, kernel_eio, bias_p)
    y = jax.block_until_ready(y)

    # Pure-JAX reference of the torch forward.
    ref = jnp.einsum("eoi,ei->eo", kernel_eoi, x.reshape(E, I)) + bias
    ref = ref.reshape(*batch_shape, O)

    assert y.shape == (*batch_shape, O), y.shape
    assert jnp.allclose(y, ref, atol=1e-5, rtol=1e-5), "mismatch vs reference"

    print("KERNEL_OK")
</pallas_src>

<mosaic_0001>
module attributes {stable_mosaic.version = 11 : i64} {
  func.func @kernel(%arg0: i32, %arg1: i32, %arg2: i32, %arg3: memref<8x128xf32, #tpu.memory_space<vmem>>, %arg4: memref<8x128x128xf32, #tpu.memory_space<vmem>>, %arg5: memref<8x128xf32, #tpu.memory_space<vmem>>, %arg6: memref<8x128xf32, #tpu.memory_space<vmem>>, %arg7: memref<8x128xf32, #tpu.memory_space<vmem>>) attributes {dimension_semantics = [#tpu.dimension_semantics<parallel>, #tpu.dimension_semantics<parallel>, #tpu.dimension_semantics<arbitrary>], iteration_bounds = array<i64: 1, 1, 1>, scalar_prefetch = 0 : i64, scratch_operands = 1 : i64, tpu.core_type = #tpu.core_type<tc>, window_params = [{transform_indices = @transform_0, window_bounds = array<i64: 8, 128>}, {transform_indices = @transform_1, window_bounds = array<i64: 8, 128, 128>}, {transform_indices = @transform_2, window_bounds = array<i64: 8, 128>}, {transform_indices = @transform_3, window_bounds = array<i64: 8, 128>}]} {
    %c0_i32 = arith.constant 0 : i32
    %0 = arith.cmpi eq, %arg2, %c0_i32 : i32
    %1 = arith.extui %0 : i1 to i32
    %c0_i32_0 = arith.constant 0 : i32
    %2 = arith.cmpi ne, %1, %c0_i32_0 : i32
    scf.if %2 {
      %cst_74 = arith.constant 0.000000e+00 : f32
      %62 = vector.broadcast %cst_74 : f32 to vector<8x128xf32>
      %c0_75 = arith.constant 0 : index
      %c0_76 = arith.constant 0 : index
      %63 = vector.load %arg7[%c0_75, %c0_76] : memref<8x128xf32, #tpu.memory_space<vmem>>, vector<8x128xf32>
      tpu.vector_store %arg7[%c0_75, %c0_76], %62 {strides = array<i32>} : memref<8x128xf32, #tpu.memory_space<vmem>>, vector<8x128xf32>,
    } else {
    }
    %c0 = arith.constant 0 : index
    %c0_1 = arith.constant 0 : index
    %3 = vector.load %arg3[%c0, %c0_1] : memref<8x128xf32, #tpu.memory_space<vmem>>, vector<1x128xf32>
    %c0_2 = arith.constant 0 : index
    %c0_3 = arith.constant 0 : index
    %c0_4 = arith.constant 0 : index
    %4 = vector.load %arg4[%c0_2, %c0_3, %c0_4] : memref<8x128x128xf32, #tpu.memory_space<vmem>>, vector<1x128x128xf32>
    %5 = vector.shape_cast %4 : vector<1x128x128xf32> to vector<128x128xf32>
    %c0_5 = arith.constant 0 : index
    %c0_6 = arith.constant 0 : index
    %6 = vector.load %arg7[%c0_5, %c0_6] : memref<8x128xf32, #tpu.memory_space<vmem>>, vector<1x128xf32>
    %cst = arith.constant dense<0.000000e+00> : vector<1x128xf32>
    %7 = tpu.matmul %3, %5, %cst {dimension_numbers = #tpu.dot_dimension_numbers<[1], [0], [0], [1], [0, 0, 1, 1], [], []>} : vector<1x128xf32>, vector<128x128xf32>, vector<1x128xf32> -> vector<1x128xf32>
    %8 = arith.addf %6, %7 : vector<1x128xf32>
    %c0_7 = arith.constant 0 : index
    %c0_8 = arith.constant 0 : index
    %9 = vector.load %arg7[%c0_7, %c0_8] : memref<8x128xf32, #tpu.memory_space<vmem>>, vector<1x128xf32>
    tpu.vector_store %arg7[%c0_7, %c0_8], %8 {strides = array<i32>} : memref<8x128xf32, #tpu.memory_space<vmem>>, vector<1x128xf32>,
    %c1 = arith.constant 1 : index
    %c0_9 = arith.constant 0 : index
    %10 = vector.load %arg3[%c1, %c0_9] : memref<8x128xf32, #tpu.memory_space<vmem>>, vector<1x128xf32>
    %c1_10 = arith.constant 1 : index
    %c0_11 = arith.constant 0 : index
    %c0_12 = arith.constant 0 : index
    %11 = vector.load %arg4[%c1_10, %c0_11, %c0_12] : memref<8x128x128xf32, #tpu.memory_space<vmem>>, vector<1x128x128xf32>
    %12 = vector.shape_cast %11 : vector<1x128x128xf32> to vector<128x128xf32>
    %c1_13 = arith.constant 1 : index
    %c0_14 = arith.constant 0 : index
    %13 = vector.load %arg7[%c1_13, %c0_14] : memref<8x128xf32, #tpu.memory_space<vmem>>, vector<1x128xf32>
    %cst_15 = arith.constant dense<0.000000e+00> : vector<1x128xf32>
    %14 = tpu.matmul %10, %12, %cst_15 {dimension_numbers = #tpu.dot_dimension_numbers<[1], [0], [0], [1], [0, 0, 1, 1], [], []>} : vector<1x128xf32>, vector<128x128xf32>, vector<1x128xf32> -> vector<1x128xf32>
    %15 = arith.addf %13, %14 : vector<1x128xf32>
    %c1_16 = arith.constant 1 : index
    %c0_17 = arith.constant 0 : index
    %16 = vector.load %arg7[%c1_16, %c0_17] : memref<8x128xf32, #tpu.memory_space<vmem>>, vector<1x128xf32>
    tpu.vector_store %arg7[%c1_16, %c0_17], %15 {strides = array<i32>} : memref<8x128xf32, #tpu.memory_space<vmem>>, vector<1x128xf32>,
    %c2 = arith.constant 2 : index
    %c0_18 = arith.constant 0 : index
    %17 = vector.load %arg3[%c2, %c0_18] : memref<8x128xf32, #tpu.memory_space<vmem>>, vector<1x128xf32>
    %c2_19 = arith.constant 2 : index
    %c0_20 = arith.constant 0 : index
    %c0_21 = arith.constant 0 : index
    %18 = vector.load %arg4[%c2_19, %c0_20, %c0_21] : memref<8x128x128xf32, #tpu.memory_space<vmem>>, vector<1x128x128xf32>
    %19 = vector.shape_cast %18 : vector<1x128x128xf32> to vector<128x128xf32>
    %c2_22 = arith.constant 2 : index
    %c0_23 = arith.constant 0 : index
    %20 = vector.load %arg7[%c2_22, %c0_23] : memref<8x128xf32, #tpu.memory_space<vmem>>, vector<1x128xf32>
    %cst_24 = arith.constant dense<0.000000e+00> : vector<1x128xf32>
    %21 = tpu.matmul %17, %19, %cst_24 {dimension_numbers = #tpu.dot_dimension_numbers<[1], [0], [0], [1], [0, 0, 1, 1], [], []>} : vector<1x128xf32>, vector<128x128xf32>, vector<1x128xf32> -> vector<1x128xf32>
    %22 = arith.addf %20, %21 : vector<1x128xf32>
    %c2_25 = arith.constant 2 : index
    %c0_26 = arith.constant 0 : index
    %23 = vector.load %arg7[%c2_25, %c0_26] : memref<8x128xf32, #tpu.memory_space<vmem>>, vector<1x128xf32>
    tpu.vector_store %arg7[%c2_25, %c0_26], %22 {strides = array<i32>} : memref<8x128xf32, #tpu.memory_space<vmem>>, vector<1x128xf32>,
    %c3 = arith.constant 3 : index
    %c0_27 = arith.constant 0 : index
    %24 = vector.load %arg3[%c3, %c0_27] : memref<8x128xf32, #tpu.memory_space<vmem>>, vector<1x128xf32>
    %c3_28 = arith.constant 3 : index
    %c0_29 = arith.constant 0 : index
    %c0_30 = arith.constant 0 : index
    %25 = vector.load %arg4[%c3_28, %c0_29, %c0_30] : memref<8x128x128xf32, #tpu.memory_space<vmem>>, vector<1x128x128xf32>
    %26 = vector.shape_cast %25 : vector<1x128x128xf32> to vector<128x128xf32>
    %c3_31 = arith.constant 3 : index
    %c0_32 = arith.constant 0 : index
    %27 = vector.load %arg7[%c3_31, %c0_32] : memref<8x128xf32, #tpu.memory_space<vmem>>, vector<1x128xf32>
    %cst_33 = arith.constant dense<0.000000e+00> : vector<1x128xf32>
    %28 = tpu.matmul %24, %26, %cst_33 {dimension_numbers = #tpu.dot_dimension_numbers<[1], [0], [0], [1], [0, 0, 1, 1], [], []>} : vector<1x128xf32>, vector<128x128xf32>, vector<1x128xf32> -> vector<1x128xf32>
    %29 = arith.addf %27, %28 : vector<1x128xf32>
    %c3_34 = arith.constant 3 : index
    %c0_35 = arith.constant 0 : index
    %30 = vector.load %arg7[%c3_34, %c0_35] : memref<8x128xf32, #tpu.memory_space<vmem>>, vector<1x128xf32>
    tpu.vector_store %arg7[%c3_34, %c0_35], %29 {strides = array<i32>} : memref<8x128xf32, #tpu.memory_space<vmem>>, vector<1x128xf32>,
    %c4 = arith.constant 4 : index
    %c0_36 = arith.constant 0 : index
    %31 = vector.load %arg3[%c4, %c0_36] : memref<8x128xf32, #tpu.memory_space<vmem>>, vector<1x128xf32>
    %c4_37 = arith.constant 4 : index
    %c0_38 = arith.constant 0 : index
    %c0_39 = arith.constant 0 : index
    %32 = vector.load %arg4[%c4_37, %c0_38, %c0_39] : memref<8x128x128xf32, #tpu.memory_space<vmem>>, vector<1x128x128xf32>
    %33 = vector.shape_cast %32 : vector<1x128x128xf32> to vector<128x128xf32>
    %c4_40 = arith.constant 4 : index
    %c0_41 = arith.constant 0 : index
    %34 = vector.load %arg7[%c4_40, %c0_41] : memref<8x128xf32, #tpu.memory_space<vmem>>, vector<1x128xf32>
    %cst_42 = arith.constant dense<0.000000e+00> : vector<1x128xf32>
    %35 = tpu.matmul %31, %33, %cst_42 {dimension_numbers = #tpu.dot_dimension_numbers<[1], [0], [0], [1], [0, 0, 1, 1], [], []>} : vector<1x128xf32>, vector<128x128xf32>, vector<1x128xf32> -> vector<1x128xf32>
    %36 = arith.addf %34, %35 : vector<1x128xf32>
    %c4_43 = arith.constant 4 : index
    %c0_44 = arith.constant 0 : index
    %37 = vector.load %arg7[%c4_43, %c0_44] : memref<8x128xf32, #tpu.memory_space<vmem>>, vector<1x128xf32>
    tpu.vector_store %arg7[%c4_43, %c0_44], %36 {strides = array<i32>} : memref<8x128xf32, #tpu.memory_space<vmem>>, vector<1x128xf32>,
    %c5 = arith.constant 5 : index
    %c0_45 = arith.constant 0 : index
    %38 = vector.load %arg3[%c5, %c0_45] : memref<8x128xf32, #tpu.memory_space<vmem>>, vector<1x128xf32>
    %c5_46 = arith.constant 5 : index
    %c0_47 = arith.constant 0 : index
    %c0_48 = arith.constant 0 : index
    %39 = vector.load %arg4[%c5_46, %c0_47, %c0_48] : memref<8x128x128xf32, #tpu.memory_space<vmem>>, vector<1x128x128xf32>
    %40 = vector.shape_cast %39 : vector<1x128x128xf32> to vector<128x128xf32>
    %c5_49 = arith.constant 5 : index
    %c0_50 = arith.constant 0 : index
    %41 = vector.load %arg7[%c5_49, %c0_50] : memref<8x128xf32, #tpu.memory_space<vmem>>, vector<1x128xf32>
    %cst_51 = arith.constant dense<0.000000e+00> : vector<1x128xf32>
    %42 = tpu.matmul %38, %40, %cst_51 {dimension_numbers = #tpu.dot_dimension_numbers<[1], [0], [0], [1], [0, 0, 1, 1], [], []>} : vector<1x128xf32>, vector<128x128xf32>, vector<1x128xf32> -> vector<1x128xf32>
    %43 = arith.addf %41, %42 : vector<1x128xf32>
    %c5_52 = arith.constant 5 : index
    %c0_53 = arith.constant 0 : index
    %44 = vector.load %arg7[%c5_52, %c0_53] : memref<8x128xf32, #tpu.memory_space<vmem>>, vector<1x128xf32>
    tpu.vector_store %arg7[%c5_52, %c0_53], %43 {strides = array<i32>} : memref<8x128xf32, #tpu.memory_space<vmem>>, vector<1x128xf32>,
    %c6 = arith.constant 6 : index
    %c0_54 = arith.constant 0 : index
    %45 = vector.load %arg3[%c6, %c0_54] : memref<8x128xf32, #tpu.memory_space<vmem>>, vector<1x128xf32>
    %c6_55 = arith.constant 6 : index
    %c0_56 = arith.constant 0 : index
    %c0_57 = arith.constant 0 : index
    %46 = vector.load %arg4[%c6_55, %c0_56, %c0_57] : memref<8x128x128xf32, #tpu.memory_space<vmem>>, vector<1x128x128xf32>
    %47 = vector.shape_cast %46 : vector<1x128x128xf32> to vector<128x128xf32>
    %c6_58 = arith.constant 6 : index
    %c0_59 = arith.constant 0 : index
    %48 = vector.load %arg7[%c6_58, %c0_59] : memref<8x128xf32, #tpu.memory_space<vmem>>, vector<1x128xf32>
    %cst_60 = arith.constant dense<0.000000e+00> : vector<1x128xf32>
    %49 = tpu.matmul %45, %47, %cst_60 {dimension_numbers = #tpu.dot_dimension_numbers<[1], [0], [0], [1], [0, 0, 1, 1], [], []>} : vector<1x128xf32>, vector<128x128xf32>, vector<1x128xf32> -> vector<1x128xf32>
    %50 = arith.addf %48, %49 : vector<1x128xf32>
    %c6_61 = arith.constant 6 : index
    %c0_62 = arith.constant 0 : index
    %51 = vector.load %arg7[%c6_61, %c0_62] : memref<8x128xf32, #tpu.memory_space<vmem>>, vector<1x128xf32>
    tpu.vector_store %arg7[%c6_61, %c0_62], %50 {strides = array<i32>} : memref<8x128xf32, #tpu.memory_space<vmem>>, vector<1x128xf32>,
    %c7 = arith.constant 7 : index
    %c0_63 = arith.constant 0 : index
    %52 = vector.load %arg3[%c7, %c0_63] : memref<8x128xf32, #tpu.memory_space<vmem>>, vector<1x128xf32>
    %c7_64 = arith.constant 7 : index
    %c0_65 = arith.constant 0 : index
    %c0_66 = arith.constant 0 : index
    %53 = vector.load %arg4[%c7_64, %c0_65, %c0_66] : memref<8x128x128xf32, #tpu.memory_space<vmem>>, vector<1x128x128xf32>
    %54 = vector.shape_cast %53 : vector<1x128x128xf32> to vector<128x128xf32>
    %c7_67 = arith.constant 7 : index
    %c0_68 = arith.constant 0 : index
    %55 = vector.load %arg7[%c7_67, %c0_68] : memref<8x128xf32, #tpu.memory_space<vmem>>, vector<1x128xf32>
    %cst_69 = arith.constant dense<0.000000e+00> : vector<1x128xf32>
    %56 = tpu.matmul %52, %54, %cst_69 {dimension_numbers = #tpu.dot_dimension_numbers<[1], [0], [0], [1], [0, 0, 1, 1], [], []>} : vector<1x128xf32>, vector<128x128xf32>, vector<1x128xf32> -> vector<1x128xf32>
    %57 = arith.addf %55, %56 : vector<1x128xf32>
    %c7_70 = arith.constant 7 : index
    %c0_71 = arith.constant 0 : index
    %58 = vector.load %arg7[%c7_70, %c0_71] : memref<8x128xf32, #tpu.memory_space<vmem>>, vector<1x128xf32>
    tpu.vector_store %arg7[%c7_70, %c0_71], %57 {strides = array<i32>} : memref<8x128xf32, #tpu.memory_space<vmem>>, vector<1x128xf32>,
    %c0_i32_72 = arith.constant 0 : i32
    %59 = arith.cmpi eq, %arg2, %c0_i32_72 : i32
    %60 = arith.extui %59 : i1 to i32
    %c0_i32_73 = arith.constant 0 : i32
    %61 = arith.cmpi ne, %60, %c0_i32_73 : i32
    scf.if %61 {
      %c0_74 = arith.constant 0 : index
      %c0_75 = arith.constant 0 : index
      %62 = vector.load %arg7[%c0_74, %c0_75] : memref<8x128xf32, #tpu.memory_space<vmem>>, vector<8x128xf32>
      %c0_76 = arith.constant 0 : index
      %c0_77 = arith.constant 0 : index
      %63 = vector.load %arg5[%c0_76, %c0_77] : memref<8x128xf32, #tpu.memory_space<vmem>>, vector<8x128xf32>
      %64 = arith.addf %62, %63 : vector<8x128xf32>
      %c0_78 = arith.constant 0 : index
      %c0_79 = arith.constant 0 : index
      %65 = vector.load %arg6[%c0_78, %c0_79] : memref<8x128xf32, #tpu.memory_space<vmem>>, vector<8x128xf32>
      tpu.vector_store %arg6[%c0_78, %c0_79], %64 {strides = array<i32>} : memref<8x128xf32, #tpu.memory_space<vmem>>, vector<8x128xf32>,
    } else {
    }
    return
  }
  func.func @transform_0(%arg0: i32, %arg1: i32, %arg2: i32) -> (i32, i32) {
    %c0_i32 = arith.constant 0 : i32
    return %arg0, %arg2 : i32, i32
  }
  func.func @transform_1(%arg0: i32, %arg1: i32, %arg2: i32) -> (i32, i32, i32) {
    %c0_i32 = arith.constant 0 : i32
    return %arg0, %arg2, %arg1 : i32, i32, i32
  }
  func.func @transform_2(%arg0: i32, %arg1: i32, %arg2: i32) -> (i32, i32) {
    %c0_i32 = arith.constant 0 : i32
    return %arg0, %arg1 : i32, i32
  }
  func.func @transform_3(%arg0: i32, %arg1: i32, %arg2: i32) -> (i32, i32) {
    %c0_i32 = arith.constant 0 : i32
    return %arg0, %arg1 : i32, i32
  }
}

</mosaic_0001>

<llo_original>
// kernel: tpu_custom_call.1
$region0: #{tpu_custom_call.1}
  #allocation0 [shape = 'u32[]', space=smem, size = 0x4, offset = 0x4, fixed_abs, tag = 'smem constant byte address 0x4 - core index']
  #allocation1 [shape = 'u32[144,128]{1,0:T(1,128)}', space=vmem, size = 0x12000, scoped, tag = 'internal scratch']
  #allocation2 [shape = 'f32[8,128]{1,0:T(8,128)}', space=vmem, size = 0x1000, scoped, tag = 'scratch operand']
  %s0 = inlined_call_operand.hbm [shape: f32[8,128], index: 0, kind: input, shape index: {}]
  %s1 = inlined_call_operand.hbm [shape: f32[8,128,128], index: 1, kind: input, shape index: {}]
  %s2 = inlined_call_operand.hbm [shape: f32[8,128], index: 2, kind: input, shape index: {}]
  %s3 = inlined_call_operand.hbm [shape: f32[8,128], index: 3, kind: output, shape index: {}]
  %s4 = sld [smem:[#allocation0]]
  $region42: #{tpu_custom_call.1} parent=0
    _
  %s6 = ssub.s32 1, %s4
  %s7 = scalar_select 0, %s6, %s4
  $region1: #{tpu_custom_call.1} parent=0
    #allocation3 [shape = 'u8[4096]{0}', space=vmem, size = 0x1000, scoped, tag = 'input window, operand 0, single buffered']
    #allocation4 [shape = 's32[1]{0}', space=sflag, size = 0x4, scoped, tag = 'scoped memory for tpu_custom_call.1']
    #allocation5 [shape = 's32[1]{0}', space=sflag, size = 0x4, scoped, tag = 'scoped memory for tpu_custom_call.1']
    #allocation6 [shape = 'u8[524288]{0}', space=vmem, size = 0x80000, scoped, tag = 'input window, operand 1, single buffered']
    #allocation7 [shape = 's32[1]{0}', space=sflag, size = 0x4, scoped, tag = 'scoped memory for tpu_custom_call.1']
    #allocation8 [shape = 'u8[4096]{0}', space=vmem, size = 0x1000, scoped, tag = 'input window, operand 2, single buffered']
    #allocation9 [shape = 'u8[4096]{0}', space=vmem, size = 0x1000, scoped, tag = 'output window, operand 0, single buffered']
    %8 = vsyncpa [#allocation4], 0
    %9 = vsyncpa [#allocation7], 0
    %10 = vsyncpa [#allocation5], 0
    // Predicated region
    $region2: #{tpu_custom_call.1} parent=1 // pred_check
      _
    $region3: #{tpu_custom_call.1} parent=1 // pred_check_branch
      %12 = sbr.rel (0) target = $region5
    $region4: #{tpu_custom_call.1} parent=1 // pred_region
      %s14 = ssub.s32 128, 128
      %15 = vsyncadd [#allocation4], %s14
      %s17 = sshll.u32 [#allocation3], 4
      %s18 = int_to_ptr.vmem [resolvable:$true] %s17
      %20 = dma.hbm_to_vmem [thread:$0]  %s0, 128, %s18, [#allocation4]
    $region5: #{tpu_custom_call.1} parent=1 // pred_fallthru
      _
    // Predicated region
    $region6: #{tpu_custom_call.1} parent=1 // pred_check
      _
    $region7: #{tpu_custom_call.1} parent=1 // pred_check_branch
      %22 = sbr.rel (0) target = $region9
    $region8: #{tpu_custom_call.1} parent=1 // pred_region
      %s24 = ssub.s32 16384, 16384
      %25 = vsyncadd [#allocation7], %s24
      %s26 = sshll.u32 [#allocation6], 4
      %s27 = int_to_ptr.vmem [resolvable:$true] %s26
      %32 = dma.hbm_to_vmem [thread:$0]  %s1, 16384, %s27, [#allocation7], 128, 128, 8
    $region9: #{tpu_custom_call.1} parent=1 // pred_fallthru
      _
    // Predicated region
    $region10: #{tpu_custom_call.1} parent=1 // pred_check
      _
    $region11: #{tpu_custom_call.1} parent=1 // pred_check_branch
      %34 = sbr.rel (0) target = $region13
    $region12: #{tpu_custom_call.1} parent=1 // pred_region
      %s36 = ssub.s32 128, 128
      %37 = vsyncadd [#allocation7], %s36
      %s39 = sshll.u32 [#allocation8], 4
      %s40 = int_to_ptr.vmem [resolvable:$true] %s39
      %42 = dma.hbm_to_vmem [thread:$0]  %s2, 128, %s40, [#allocation7]
    $region13: #{tpu_custom_call.1} parent=1 // pred_fallthru
      _
    // Predicated region
    $region14: #{tpu_custom_call.1} parent=1 // pred_check
      _
    $region15: #{tpu_custom_call.1} parent=1 // pred_check_branch
      %44 = sbr.rel (0) target = $region17
    $region16: #{tpu_custom_call.1} parent=1 // pred_region
      %45 = dma.done [#allocation4], 128
    $region17: #{tpu_custom_call.1} parent=1 // pred_fallthru
      _
    // Predicated region
    $region18: #{tpu_custom_call.1} parent=1 // pred_check
      _
    $region19: #{tpu_custom_call.1} parent=1 // pred_check_branch
      %47 = sbr.rel (0) target = $region21
    $region20: #{tpu_custom_call.1} parent=1 // pred_region
      %48 = dma.done [#allocation7], 16384
    $region21: #{tpu_custom_call.1} parent=1 // pred_fallthru
      _
    // Predicated region
    $region22: #{tpu_custom_call.1} parent=1 // pred_check
      _
    $region23: #{tpu_custom_call.1} parent=1 // pred_check_branch
      %50 = sbr.rel (0) target = $region25
    $region24: #{tpu_custom_call.1} parent=1 // pred_region
      %51 = dma.done [#allocation7], 128
    $region25: #{tpu_custom_call.1} parent=1 // pred_fallthru
      _
    %p52 = scmp.eq.s32.totalorder 0, 0
    // Predicated region
    $region26: #{tpu_custom_call.1} parent=1 // pred_check
      %p53 = pneg %p52
    $region27: #{tpu_custom_call.1} parent=1 // pred_check_branch
      %55 = sbr.rel (%p53) target = $region29
    $region28: #{tpu_custom_call.1} parent=1 // pred_region
      %56 = vst [vmem:[#allocation2] sm:$0xff] 0.0
    $region29: #{tpu_custom_call.1} parent=1 // pred_fallthru
      _
    %v57 = vld [vmem:[#allocation3] sm:$0x1]
    %v58 = vld [vmem:[#allocation6] sm:$0xff]
    %v59 = vld [vmem:[#allocation6 + $0x8] sm:$0xff]
    %v60 = vld [vmem:[#allocation6 + $0x10] sm:$0xff]
    %v61 = vld [vmem:[#allocation6 + $0x18] sm:$0xff]
    %v62 = vld [vmem:[#allocation6 + $0x20] sm:$0xff]
    %v63 = vld [vmem:[#allocation6 + $0x28] sm:$0xff]
    %v64 = vld [vmem:[#allocation6 + $0x30] sm:$0xff]
    %v65 = vld [vmem:[#allocation6 + $0x38] sm:$0xff]
    %v66 = vld [vmem:[#allocation6 + $0x40] sm:$0xff]
    %v67 = vld [vmem:[#allocation6 + $0x48] sm:$0xff]
    %v68 = vld [vmem:[#allocation6 + $0x50] sm:$0xff]
    %v69 = vld [vmem:[#allocation6 + $0x58] sm:$0xff]
    %v70 = vld [vmem:[#allocation6 + $0x60] sm:$0xff]
    %v71 = vld [vmem:[#allocation6 + $0x68] sm:$0xff]
    %v72 = vld [vmem:[#allocation6 + $0x70] sm:$0xff]
    %v73 = vld [vmem:[#allocation6 + $0x78] sm:$0xff]
    %v74 = vld [vmem:[#allocation2] sm:$0x1]
    %75 = vmatprep.subr.mxu0 0.0
    %76 = vmatpush1.msra.mxu0 %v58
    %77 = vmatprep.subr.mxu0 0.0
    %78 = vmatpush1.msra.mxu0 %v59
    %79 = vmatprep.subr.mxu0 0.0
    %80 = vmatpush1.msra.mxu0 %v60
    %81 = vmatprep.subr.mxu0 0.0
    %82 = vmatpush1.msra.mxu0 %v61
    %83 = vmatprep.subr.mxu0 0.0
    %84 = vmatpush1.msra.mxu0 %v62
    %85 = vmatprep.subr.mxu0 0.0
    %86 = vmatpush1.msra.mxu0 %v63
    %87 = vmatprep.subr.mxu0 0.0
    %88 = vmatpush1.msra.mxu0 %v64
    %89 = vmatprep.subr.mxu0 0.0
    %90 = vmatpush1.msra.mxu0 %v65
    %91 = vmatprep.subr.mxu0 0.0
    %92 = vmatpush1.msra.mxu0 %v66
    %93 = vmatprep.subr.mxu0 0.0
    %94 = vmatpush1.msra.mxu0 %v67
    %95 = vmatprep.subr.mxu0 0.0
    %96 = vmatpush1.msra.mxu0 %v68
    %97 = vmatprep.subr.mxu0 0.0
    %98 = vmatpush1.msra.mxu0 %v69
    %99 = vmatprep.subr.mxu0 0.0
    %100 = vmatpush1.msra.mxu0 %v70
    %101 = vmatprep.subr.mxu0 0.0
    %102 = vmatpush1.msra.mxu0 %v71
    %103 = vmatprep.subr.mxu0 0.0
    %104 = vmatpush1.msra.mxu0 %v72
    %105 = vmatprep.subr.mxu0 0.0
    %106 = vmatpush1.msra.mxu0 %v73
    %107 = vmatprep.subr.mxu0 0.0
    %108 = vmatpush1.msra.mxu0 0.0
    %109 = vmatprep.subr.mxu0 0.0
    %110 = vmatpush1.msra.mxu0 0.0
    %111 = vmatprep.subr.mxu0 0.0
    %112 = vmatpush1.msra.mxu0 0.0
    %113 = vmatprep.subr.mxu0 0.0
    %114 = vmatpush1.msra.mxu0 0.0
    %115 = vmatprep.subr.mxu0 0.0
    %116 = vmatpush1.msra.mxu0 0.0
    %117 = vmatprep.subr.mxu0 0.0
    %118 = vmatpush1.msra.mxu0 0.0
    %119 = vmatprep.subr.mxu0 0.0
    %120 = vmatpush1.msra.mxu0 0.0
    %121 = vmatprep.subr.mxu0 0.0
    %122 = vmatpush1.msra.mxu0 0.0
    %123 = vmatprep.subr.mxu0 0.0
    %124 = vmatpush1.msra.mxu0 0.0
    %125 = vmatprep.subr.mxu0 0.0
    %126 = vmatpush1.msra.mxu0 0.0
    %127 = vmatprep.subr.mxu0 0.0
    %128 = vmatpush1.msra.mxu0 0.0
    %129 = vmatprep.subr.mxu0 0.0
    %130 = vmatpush1.msra.mxu0 0.0
    %131 = vmatprep.subr.mxu0 0.0
    %132 = vmatpush1.msra.mxu0 0.0
    %133 = vmatprep.subr.mxu0 0.0
    %134 = vmatpush1.msra.mxu0 0.0
    %135 = vmatprep.subr.mxu0 0.0
    %136 = vmatpush1.msra.mxu0 0.0
    %137 = vmatprep.subr.mxu0 0.0
    %138 = vmatpush1.msra.mxu0 0.0
    %139 = vmatprep.mubr.f32.mxu0 0.0
    %140 = vmatmul.mubr.f32.gmra.mrb[0].mxu0 %v57
    %v141 = vpop.f32.mrb[0].mxu0
    %v142 = vadd.f32 0.0, %v141
    %v143 = vpop.f32.mrb[0].mxu0
    %144 = vdwg.mxu0
    %v145 = vadd.f32 %v74, %v142
    %146 = vst [vmem:[#allocation2] sm:$0x1] %v145
    %v147 = vld [vmem:[#allocation3 + $0x1] sm:$0x1]
    %s148 = scalar_lea.vmem [#allocation6], 128
    %v149 = vld [vmem:[%s148] sm:$0xff]
    %v150 = vld [vmem:[%s148 + $0x8] sm:$0xff]
    %v151 = vld [vmem:[%s148 + $0x10] sm:$0xff]
    %v152 = vld [vmem:[%s148 + $0x18] sm:$0xff]
    %v153 = vld [vmem:[%s148 + $0x20] sm:$0xff]
    %v154 = vld [vmem:[%s148 + $0x28] sm:$0xff]
    %v155 = vld [vmem:[%s148 + $0x30] sm:$0xff]
    %v156 = vld [vmem:[%s148 + $0x38] sm:$0xff]
    %v157 = vld [vmem:[%s148 + $0x40] sm:$0xff]
    %v158 = vld [vmem:[%s148 + $0x48] sm:$0xff]
    %v159 = vld [vmem:[%s148 + $0x50] sm:$0xff]
    %v160 = vld [vmem:[%s148 + $0x58] sm:$0xff]
    %v161 = vld [vmem:[%s148 + $0x60] sm:$0xff]
    %v162 = vld [vmem:[%s148 + $0x68] sm:$0xff]
    %v163 = vld [vmem:[%s148 + $0x70] sm:$0xff]
    %v164 = vld [vmem:[%s148 + $0x78] sm:$0xff]
    %v165 = vld [vmem:[#allocation2 + $0x1] sm:$0x1]
    %166 = vmatprep.subr.mxu0 0.0
    %167 = vmatpush1.msra.mxu0 %v149
    %168 = vmatprep.subr.mxu0 0.0
    %169 = vmatpush1.msra.mxu0 %v150
    %170 = vmatprep.subr.mxu0 0.0
    %171 = vmatpush1.msra.mxu0 %v151
    %172 = vmatprep.subr.mxu0 0.0
    %173 = vmatpush1.msra.mxu0 %v152
    %174 = vmatprep.subr.mxu0 0.0
    %175 = vmatpush1.msra.mxu0 %v153
    %176 = vmatprep.subr.mxu0 0.0
    %177 = vmatpush1.msra.mxu0 %v154
    %178 = vmatprep.subr.mxu0 0.0
    %179 = vmatpush1.msra.mxu0 %v155
    %180 = vmatprep.subr.mxu0 0.0
    %181 = vmatpush1.msra.mxu0 %v156
    %182 = vmatprep.subr.mxu0 0.0
    %183 = vmatpush1.msra.mxu0 %v157
    %184 = vmatprep.subr.mxu0 0.0
    %185 = vmatpush1.msra.mxu0 %v158
    %186 = vmatprep.subr.mxu0 0.0
    %187 = vmatpush1.msra.mxu0 %v159
    %188 = vmatprep.subr.mxu0 0.0
    %189 = vmatpush1.msra.mxu0 %v160
    %190 = vmatprep.subr.mxu0 0.0
    %191 = vmatpush1.msra.mxu0 %v161
    %192 = vmatprep.subr.mxu0 0.0
    %193 = vmatpush1.msra.mxu0 %v162
    %194 = vmatprep.subr.mxu0 0.0
    %195 = vmatpush1.msra.mxu0 %v163
    %196 = vmatprep.subr.mxu0 0.0
    %197 = vmatpush1.msra.mxu0 %v164
    %198 = vmatprep.subr.mxu0 0.0
    %199 = vmatpush1.msra.mxu0 0.0
    %200 = vmatprep.subr.mxu0 0.0
    %201 = vmatpush1.msra.mxu0 0.0
    %202 = vmatprep.subr.mxu0 0.0
    %203 = vmatpush1.msra.mxu0 0.0
    %204 = vmatprep.subr.mxu0 0.0
    %205 = vmatpush1.msra.mxu0 0.0
    %206 = vmatprep.subr.mxu0 0.0
    %207 = vmatpush1.msra.mxu0 0.0
    %208 = vmatprep.subr.mxu0 0.0
    %209 = vmatpush1.msra.mxu0 0.0
    %210 = vmatprep.subr.mxu0 0.0
    %211 = vmatpush1.msra.mxu0 0.0
    %212 = vmatprep.subr.mxu0 0.0
    %213 = vmatpush1.msra.mxu0 0.0
    %214 = vmatprep.subr.mxu0 0.0
    %215 = vmatpush1.msra.mxu0 0.0
    %216 = vmatprep.subr.mxu0 0.0
    %217 = vmatpush1.msra.mxu0 0.0
    %218 = vmatprep.subr.mxu0 0.0
    %219 = vmatpush1.msra.mxu0 0.0
    %220 = vmatprep.subr.mxu0 0.0
    %221 = vmatpush1.msra.mxu0 0.0
    %222 = vmatprep.subr.mxu0 0.0
    %223 = vmatpush1.msra.mxu0 0.0
    %224 = vmatprep.subr.mxu0 0.0
    %225 = vmatpush1.msra.mxu0 0.0
    %226 = vmatprep.subr.mxu0 0.0
    %227 = vmatpush1.msra.mxu0 0.0
    %228 = vmatprep.subr.mxu0 0.0
    %229 = vmatpush1.msra.mxu0 0.0
    %230 = vmatprep.mubr.f32.mxu0 0.0
    %231 = vmatmul.mubr.f32.gmra.mrb[0].mxu0 %v147
    %v232 = vpop.f32.mrb[0].mxu0
    %v233 = vadd.f32 0.0, %v232
    %v234 = vpop.f32.mrb[0].mxu0
    %235 = vdwg.mxu0
    %v236 = vadd.f32 %v165, %v233
    %237 = vst [vmem:[#allocation2 + $0x1] sm:$0x1] %v236
    %v238 = vld [vmem:[#allocation3 + $0x2] sm:$0x1]
    %s239 = scalar_lea.vmem [#allocation6], 256
    %v240 = vld [vmem:[%s239] sm:$0xff]
    %v241 = vld [vmem:[%s239 + $0x8] sm:$0xff]
    %v242 = vld [vmem:[%s239 + $0x10] sm:$0xff]
    %v243 = vld [vmem:[%s239 + $0x18] sm:$0xff]
    %v244 = vld [vmem:[%s239 + $0x20] sm:$0xff]
    %v245 = vld [vmem:[%s239 + $0x28] sm:$0xff]
    %v246 = vld [vmem:[%s239 + $0x30] sm:$0xff]
    %v247 = vld [vmem:[%s239 + $0x38] sm:$0xff]
    %v248 = vld [vmem:[%s239 + $0x40] sm:$0xff]
    %v249 = vld [vmem:[%s239 + $0x48] sm:$0xff]
    %v250 = vld [vmem:[%s239 + $0x50] sm:$0xff]
    %v251 = vld [vmem:[%s239 + $0x58] sm:$0xff]
    %v252 = vld [vmem:[%s239 + $0x60] sm:$0xff]
    %v253 = vld [vmem:[%s239 + $0x68] sm:$0xff]
    %v254 = vld [vmem:[%s239 + $0x70] sm:$0xff]
    %v255 = vld [vmem:[%s239 + $0x78] sm:$0xff]
    %v256 = vld [vmem:[#allocation2 + $0x2] sm:$0x1]
    %257 = vmatprep.subr.mxu0 0.0
    %258 = vmatpush1.msra.mxu0 %v240
    %259 = vmatprep.subr.mxu0 0.0
    %260 = vmatpush1.msra.mxu0 %v241
    %261 = vmatprep.subr.mxu0 0.0
    %262 = vmatpush1.msra.mxu0 %v242
    %263 = vmatprep.subr.mxu0 0.0
    %264 = vmatpush1.msra.mxu0 %v243
    %265 = vmatprep.subr.mxu0 0.0
    %266 = vmatpush1.msra.mxu0 %v244
    %267 = vmatprep.subr.mxu0 0.0
    %268 = vmatpush1.msra.mxu0 %v245
    %269 = vmatprep.subr.mxu0 0.0
    %270 = vmatpush1.msra.mxu0 %v246
    %271 = vmatprep.subr.mxu0 0.0
    %272 = vmatpush1.msra.mxu0 %v247
    %273 = vmatprep.subr.mxu0 0.0
    %274 = vmatpush1.msra.mxu0 %v248
    %275 = vmatprep.subr.mxu0 0.0
    %276 = vmatpush1.msra.mxu0 %v249
    %277 = vmatprep.subr.mxu0 0.0
    %278 = vmatpush1.msra.mxu0 %v250
    %279 = vmatprep.subr.mxu0 0.0
    %280 = vmatpush1.msra.mxu0 %v251
    %281 = vmatprep.subr.mxu0 0.0
    %282 = vmatpush1.msra.mxu0 %v252
    %283 = vmatprep.subr.mxu0 0.0
    %284 = vmatpush1.msra.mxu0 %v253
    %285 = vmatprep.subr.mxu0 0.0
    %286 = vmatpush1.msra.mxu0 %v254
    %287 = vmatprep.subr.mxu0 0.0
    %288 = vmatpush1.msra.mxu0 %v255
    %289 = vmatprep.subr.mxu0 0.0
    %290 = vmatpush1.msra.mxu0 0.0
    %291 = vmatprep.subr.mxu0 0.0
    %292 = vmatpush1.msra.mxu0 0.0
    %293 = vmatprep.subr.mxu0 0.0
    %294 = vmatpush1.msra.mxu0 0.0
    %295 = vmatprep.subr.mxu0 0.0
    %296 = vmatpush1.msra.mxu0 0.0
    %297 = vmatprep.subr.mxu0 0.0
    %298 = vmatpush1.msra.mxu0 0.0
    %299 = vmatprep.subr.mxu0 0.0
    %300 = vmatpush1.msra.mxu0 0.0
    %301 = vmatprep.subr.mxu0 0.0
    %302 = vmatpush1.msra.mxu0 0.0
    %303 = vmatprep.subr.mxu0 0.0
    %304 = vmatpush1.msra.mxu0 0.0
    %305 = vmatprep.subr.mxu0 0.0
    %306 = vmatpush1.msra.mxu0 0.0
    %307 = vmatprep.subr.mxu0 0.0
    %308 = vmatpush1.msra.mxu0 0.0
    %309 = vmatprep.subr.mxu0 0.0
    %310 = vmatpush1.msra.mxu0 0.0
    %311 = vmatprep.subr.mxu0 0.0
    %312 = vmatpush1.msra.mxu0 0.0
    %313 = vmatprep.subr.mxu0 0.0
    %314 = vmatpush1.msra.mxu0 0.0
    %315 = vmatprep.subr.mxu0 0.0
    %316 = vmatpush1.msra.mxu0 0.0
    %317 = vmatprep.subr.mxu0 0.0
    %318 = vmatpush1.msra.mxu0 0.0
    %319 = vmatprep.subr.mxu0 0.0
    %320 = vmatpush1.msra.mxu0 0.0
    %321 = vmatprep.mubr.f32.mxu0 0.0
    %322 = vmatmul.mubr.f32.gmra.mrb[0].mxu0 %v238
    %v323 = vpop.f32.mrb[0].mxu0
    %v324 = vadd.f32 0.0, %v323
    %v325 = vpop.f32.mrb[0].mxu0
    %326 = vdwg.mxu0
    %v327 = vadd.f32 %v256, %v324
    %328 = vst [vmem:[#allocation2 + $0x2] sm:$0x1] %v327
    %v329 = vld [vmem:[#allocation3 + $0x3] sm:$0x1]
    %s330 = scalar_lea.vmem [#allocation6], 384
    %v331 = vld [vmem:[%s330] sm:$0xff]
    %v332 = vld [vmem:[%s330 + $0x8] sm:$0xff]
    %v333 = vld [vmem:[%s330 + $0x10] sm:$0xff]
    %v334 = vld [vmem:[%s330 + $0x18] sm:$0xff]
    %v335 = vld [vmem:[%s330 + $0x20] sm:$0xff]
    %v336 = vld [vmem:[%s330 + $0x28] sm:$0xff]
    %v337 = vld [vmem:[%s330 + $0x30] sm:$0xff]
    %v338 = vld [vmem:[%s330 + $0x38] sm:$0xff]
    %v339 = vld [vmem:[%s330 + $0x40] sm:$0xff]
    %v340 = vld [vmem:[%s330 + $0x48] sm:$0xff]
    %v341 = vld [vmem:[%s330 + $0x50] sm:$0xff]
    %v342 = vld [vmem:[%s330 + $0x58] sm:$0xff]
    %v343 = vld [vmem:[%s330 + $0x60] sm:$0xff]
    %v344 = vld [vmem:[%s330 + $0x68] sm:$0xff]
    %v345 = vld [vmem:[%s330 + $0x70] sm:$0xff]
    %v346 = vld [vmem:[%s330 + $0x78] sm:$0xff]
    %v347 = vld [vmem:[#allocation2 + $0x3] sm:$0x1]
    %348 = vmatprep.subr.mxu0 0.0
    %349 = vmatpush1.msra.mxu0 %v331
    %350 = vmatprep.subr.mxu0 0.0
    %351 = vmatpush1.msra.mxu0 %v332
    %352 = vmatprep.subr.mxu0 0.0
    %353 = vmatpush1.msra.mxu0 %v333
    %354 = vmatprep.subr.mxu0 0.0
    %355 = vmatpush1.msra.mxu0 %v334
    %356 = vmatprep.subr.mxu0 0.0
    %357 = vmatpush1.msra.mxu0 %v335
    %358 = vmatprep.subr.mxu0 0.0
    %359 = vmatpush1.msra.mxu0 %v336
    %360 = vmatprep.subr.mxu0 0.0
    %361 = vmatpush1.msra.mxu0 %v337
    %362 = vmatprep.subr.mxu0 0.0
    %363 = vmatpush1.msra.mxu0 %v338
    %364 = vmatprep.subr.mxu0 0.0
    %365 = vmatpush1.msra.mxu0 %v339
    %366 = vmatprep.subr.mxu0 0.0
    %367 = vmatpush1.msra.mxu0 %v340
    %368 = vmatprep.subr.mxu0 0.0
    %369 = vmatpush1.msra.mxu0 %v341
    %370 = vmatprep.subr.mxu0 0.0
    %371 = vmatpush1.msra.mxu0 %v342
    %372 = vmatprep.subr.mxu0 0.0
    %373 = vmatpush1.msra.mxu0 %v343
    %374 = vmatprep.subr.mxu0 0.0
    %375 = vmatpush1.msra.mxu0 %v344
    %376 = vmatprep.subr.mxu0 0.0
    %377 = vmatpush1.msra.mxu0 %v345
    %378 = vmatprep.subr.mxu0 0.0
    %379 = vmatpush1.msra.mxu0 %v346
    %380 = vmatprep.subr.mxu0 0.0
    %381 = vmatpush1.msra.mxu0 0.0
    %382 = vmatprep.subr.mxu0 0.0
    %383 = vmatpush1.msra.mxu0 0.0
    %384 = vmatprep.subr.mxu0 0.0
    %385 = vmatpush1.msra.mxu0 0.0
    %386 = vmatprep.subr.mxu0 0.0
    %387 = vmatpush1.msra.mxu0 0.0
    %388 = vmatprep.subr.mxu0 0.0
    %389 = vmatpush1.msra.mxu0 0.0
    %390 = vmatprep.subr.mxu0 0.0
    %391 = vmatpush1.msra.mxu0 0.0
    %392 = vmatprep.subr.mxu0 0.0
    %393 = vmatpush1.msra.mxu0 0.0
    %394 = vmatprep.subr.mxu0 0.0
    %395 = vmatpush1.msra.mxu0 0.0
    %396 = vmatprep.subr.mxu0 0.0
    %397 = vmatpush1.msra.mxu0 0.0
    %398 = vmatprep.subr.mxu0 0.0
    %399 = vmatpush1.msra.mxu0 0.0
    %400 = vmatprep.subr.mxu0 0.0
    %401 = vmatpush1.msra.mxu0 0.0
    %402 = vmatprep.subr.mxu0 0.0
    %403 = vmatpush1.msra.mxu0 0.0
    %404 = vmatprep.subr.mxu0 0.0
    %405 = vmatpush1.msra.mxu0 0.0
    %406 = vmatprep.subr.mxu0 0.0
    %407 = vmatpush1.msra.mxu0 0.0
    %408 = vmatprep.subr.mxu0 0.0
    %409 = vmatpush1.msra.mxu0 0.0
    %410 = vmatprep.subr.mxu0 0.0
    %411 = vmatpush1.msra.mxu0 0.0
    %412 = vmatprep.mubr.f32.mxu0 0.0
    %413 = vmatmul.mubr.f32.gmra.mrb[0].mxu0 %v329
    %v414 = vpop.f32.mrb[0].mxu0
    %v415 = vadd.f32 0.0, %v414
    %v416 = vpop.f32.mrb[0].mxu0
    %417 = vdwg.mxu0
    %v418 = vadd.f32 %v347, %v415
    %419 = vst [vmem:[#allocation2 + $0x3] sm:$0x1] %v418
    %v420 = vld [vmem:[#allocation3 + $0x4] sm:$0x1]
    %s421 = scalar_lea.vmem [#allocation6], 512
    %v422 = vld [vmem:[%s421] sm:$0xff]
    %v423 = vld [vmem:[%s421 + $0x8] sm:$0xff]
    %v424 = vld [vmem:[%s421 + $0x10] sm:$0xff]
    %v425 = vld [vmem:[%s421 + $0x18] sm:$0xff]
    %v426 = vld [vmem:[%s421 + $0x20] sm:$0xff]
    %v427 = vld [vmem:[%s421 + $0x28] sm:$0xff]
    %v428 = vld [vmem:[%s421 + $0x30] sm:$0xff]
    %v429 = vld [vmem:[%s421 + $0x38] sm:$0xff]
    %v430 = vld [vmem:[%s421 + $0x40] sm:$0xff]
    %v431 = vld [vmem:[%s421 + $0x48] sm:$0xff]
    %v432 = vld [vmem:[%s421 + $0x50] sm:$0xff]
    %v433 = vld [vmem:[%s421 + $0x58] sm:$0xff]
    %v434 = vld [vmem:[%s421 + $0x60] sm:$0xff]
    %v435 = vld [vmem:[%s421 + $0x68] sm:$0xff]
    %v436 = vld [vmem:[%s421 + $0x70] sm:$0xff]
    %v437 = vld [vmem:[%s421 + $0x78] sm:$0xff]
    %v438 = vld [vmem:[#allocation2 + $0x4] sm:$0x1]
    %439 = vmatprep.subr.mxu0 0.0
    %440 = vmatpush1.msra.mxu0 %v422
    %441 = vmatprep.subr.mxu0 0.0
    %442 = vmatpush1.msra.mxu0 %v423
    %443 = vmatprep.subr.mxu0 0.0
    %444 = vmatpush1.msra.mxu0 %v424
    %445 = vmatprep.subr.mxu0 0.0
    %446 = vmatpush1.msra.mxu0 %v425
    %447 = vmatprep.subr.mxu0 0.0
    %448 = vmatpush1.msra.mxu0 %v426
    %449 = vmatprep.subr.mxu0 0.0
    %450 = vmatpush1.msra.mxu0 %v427
    %451 = vmatprep.subr.mxu0 0.0
    %452 = vmatpush1.msra.mxu0 %v428
    %453 = vmatprep.subr.mxu0 0.0
    %454 = vmatpush1.msra.mxu0 %v429
    %455 = vmatprep.subr.mxu0 0.0
    %456 = vmatpush1.msra.mxu0 %v430
    %457 = vmatprep.subr.mxu0 0.0
    %458 = vmatpush1.msra.mxu0 %v431
    %459 = vmatprep.subr.mxu0 0.0
    %460 = vmatpush1.msra.mxu0 %v432
    %461 = vmatprep.subr.mxu0 0.0
    %462 = vmatpush1.msra.mxu0 %v433
    %463 = vmatprep.subr.mxu0 0.0
    %464 = vmatpush1.msra.mxu0 %v434
    %465 = vmatprep.subr.mxu0 0.0
    %466 = vmatpush1.msra.mxu0 %v435
    %467 = vmatprep.subr.mxu0 0.0
    %468 = vmatpush1.msra.mxu0 %v436
    %469 = vmatprep.subr.mxu0 0.0
    %470 = vmatpush1.msra.mxu0 %v437
    %471 = vmatprep.subr.mxu0 0.0
    %472 = vmatpush1.msra.mxu0 0.0
    %473 = vmatprep.subr.mxu0 0.0
    %474 = vmatpush1.msra.mxu0 0.0
    %475 = vmatprep.subr.mxu0 0.0
    %476 = vmatpush1.msra.mxu0 0.0
    %477 = vmatprep.subr.mxu0 0.0
    %478 = vmatpush1.msra.mxu0 0.0
    %479 = vmatprep.subr.mxu0 0.0
    %480 = vmatpush1.msra.mxu0 0.0
    %481 = vmatprep.subr.mxu0 0.0
    %482 = vmatpush1.msra.mxu0 0.0
    %483 = vmatprep.subr.mxu0 0.0
    %484 = vmatpush1.msra.mxu0 0.0
    %485 = vmatprep.subr.mxu0 0.0
    %486 = vmatpush1.msra.mxu0 0.0
    %487 = vmatprep.subr.mxu0 0.0
    %488 = vmatpush1.msra.mxu0 0.0
    %489 = vmatprep.subr.mxu0 0.0
    %490 = vmatpush1.msra.mxu0 0.0
    %491 = vmatprep.subr.mxu0 0.0
    %492 = vmatpush1.msra.mxu0 0.0
    %493 = vmatprep.subr.mxu0 0.0
    %494 = vmatpush1.msra.mxu0 0.0
    %495 = vmatprep.subr.mxu0 0.0
    %496 = vmatpush1.msra.mxu0 0.0
    %497 = vmatprep.subr.mxu0 0.0
    %498 = vmatpush1.msra.mxu0 0.0
    %499 = vmatprep.subr.mxu0 0.0
    %500 = vmatpush1.msra.mxu0 0.0
    %501 = vmatprep.subr.mxu0 0.0
    %502 = vmatpush1.msra.mxu0 0.0
    %503 = vmatprep.mubr.f32.mxu0 0.0
    %504 = vmatmul.mubr.f32.gmra.mrb[0].mxu0 %v420
    %v505 = vpop.f32.mrb[0].mxu0
    %v506 = vadd.f32 0.0, %v505
    %v507 = vpop.f32.mrb[0].mxu0
    %508 = vdwg.mxu0
    %v509 = vadd.f32 %v438, %v506
    %510 = vst [vmem:[#allocation2 + $0x4] sm:$0x1] %v509
    %v511 = vld [vmem:[#allocation3 + $0x5] sm:$0x1]
    %s512 = scalar_lea.vmem [#allocation6], 640
    %v513 = vld [vmem:[%s512] sm:$0xff]
    %v514 = vld [vmem:[%s512 + $0x8] sm:$0xff]
    %v515 = vld [vmem:[%s512 + $0x10] sm:$0xff]
    %v516 = vld [vmem:[%s512 + $0x18] sm:$0xff]
    %v517 = vld [vmem:[%s512 + $0x20] sm:$0xff]
    %v518 = vld [vmem:[%s512 + $0x28] sm:$0xff]
    %v519 = vld [vmem:[%s512 + $0x30] sm:$0xff]
    %v520 = vld [vmem:[%s512 + $0x38] sm:$0xff]
    %v521 = vld [vmem:[%s512 + $0x40] sm:$0xff]
    %v522 = vld [vmem:[%s512 + $0x48] sm:$0xff]
    %v523 = vld [vmem:[%s512 + $0x50] sm:$0xff]
    %v524 = vld [vmem:[%s512 + $0x58] sm:$0xff]
    %v525 = vld [vmem:[%s512 + $0x60] sm:$0xff]
    %v526 = vld [vmem:[%s512 + $0x68] sm:$0xff]
    %v527 = vld [vmem:[%s512 + $0x70] sm:$0xff]
    %v528 = vld [vmem:[%s512 + $0x78] sm:$0xff]
    %v529 = vld [vmem:[#allocation2 + $0x5] sm:$0x1]
    %530 = vmatprep.subr.mxu0 0.0
    %531 = vmatpush1.msra.mxu0 %v513
    %532 = vmatprep.subr.mxu0 0.0
    %533 = vmatpush1.msra.mxu0 %v514
    %534 = vmatprep.subr.mxu0 0.0
    %535 = vmatpush1.msra.mxu0 %v515
    %536 = vmatprep.subr.mxu0 0.0
    %537 = vmatpush1.msra.mxu0 %v516
    %538 = vmatprep.subr.mxu0 0.0
    %539 = vmatpush1.msra.mxu0 %v517
    %540 = vmatprep.subr.mxu0 0.0
    %541 = vmatpush1.msra.mxu0 %v518
    %542 = vmatprep.subr.mxu0 0.0
    %543 = vmatpush1.msra.mxu0 %v519
    %544 = vmatprep.subr.mxu0 0.0
    %545 = vmatpush1.msra.mxu0 %v520
    %546 = vmatprep.subr.mxu0 0.0
    %547 = vmatpush1.msra.mxu0 %v521
    %548 = vmatprep.subr.mxu0 0.0
    %549 = vmatpush1.msra.mxu0 %v522
    %550 = vmatprep.subr.mxu0 0.0
    %551 = vmatpush1.msra.mxu0 %v523
    %552 = vmatprep.subr.mxu0 0.0
    %553 = vmatpush1.msra.mxu0 %v524
    %554 = vmatprep.subr.mxu0 0.0
    %555 = vmatpush1.msra.mxu0 %v525
    %556 = vmatprep.subr.mxu0 0.0
    %557 = vmatpush1.msra.mxu0 %v526
    %558 = vmatprep.subr.mxu0 0.0
    %559 = vmatpush1.msra.mxu0 %v527
    %560 = vmatprep.subr.mxu0 0.0
    %561 = vmatpush1.msra.mxu0 %v528
    %562 = vmatprep.subr.mxu0 0.0
    %563 = vmatpush1.msra.mxu0 0.0
    %564 = vmatprep.subr.mxu0 0.0
    %565 = vmatpush1.msra.mxu0 0.0
    %566 = vmatprep.subr.mxu0 0.0
    %567 = vmatpush1.msra.mxu0 0.0
    %568 = vmatprep.subr.mxu0 0.0
    %569 = vmatpush1.msra.mxu0 0.0
    %570 = vmatprep.subr.mxu0 0.0
    %571 = vmatpush1.msra.mxu0 0.0
    %572 = vmatprep.subr.mxu0 0.0
    %573 = vmatpush1.msra.mxu0 0.0
    %574 = vmatprep.subr.mxu0 0.0
    %575 = vmatpush1.msra.mxu0 0.0
    %576 = vmatprep.subr.mxu0 0.0
    %577 = vmatpush1.msra.mxu0 0.0
    %578 = vmatprep.subr.mxu0 0.0
    %579 = vmatpush1.msra.mxu0 0.0
    %580 = vmatprep.subr.mxu0 0.0
    %581 = vmatpush1.msra.mxu0 0.0
    %582 = vmatprep.subr.mxu0 0.0
    %583 = vmatpush1.msra.mxu0 0.0
    %584 = vmatprep.subr.mxu0 0.0
    %585 = vmatpush1.msra.mxu0 0.0
    %586 = vmatprep.subr.mxu0 0.0
    %587 = vmatpush1.msra.mxu0 0.0
    %588 = vmatprep.subr.mxu0 0.0
    %589 = vmatpush1.msra.mxu0 0.0
    %590 = vmatprep.subr.mxu0 0.0
    %591 = vmatpush1.msra.mxu0 0.0
    %592 = vmatprep.subr.mxu0 0.0
    %593 = vmatpush1.msra.mxu0 0.0
    %594 = vmatprep.mubr.f32.mxu0 0.0
    %595 = vmatmul.mubr.f32.gmra.mrb[0].mxu0 %v511
    %v596 = vpop.f32.mrb[0].mxu0
    %v597 = vadd.f32 0.0, %v596
    %v598 = vpop.f32.mrb[0].mxu0
    %599 = vdwg.mxu0
    %v600 = vadd.f32 %v529, %v597
    %601 = vst [vmem:[#allocation2 + $0x5] sm:$0x1] %v600
    %v602 = vld [vmem:[#allocation3 + $0x6] sm:$0x1]
    %s603 = scalar_lea.vmem [#allocation6], 768
    %v604 = vld [vmem:[%s603] sm:$0xff]
    %v605 = vld [vmem:[%s603 + $0x8] sm:$0xff]
    %v606 = vld [vmem:[%s603 + $0x10] sm:$0xff]
    %v607 = vld [vmem:[%s603 + $0x18] sm:$0xff]
    %v608 = vld [vmem:[%s603 + $0x20] sm:$0xff]
    %v609 = vld [vmem:[%s603 + $0x28] sm:$0xff]
    %v610 = vld [vmem:[%s603 + $0x30] sm:$0xff]
    %v611 = vld [vmem:[%s603 + $0x38] sm:$0xff]
    %v612 = vld [vmem:[%s603 + $0x40] sm:$0xff]
    %v613 = vld [vmem:[%s603 + $0x48] sm:$0xff]
    %v614 = vld [vmem:[%s603 + $0x50] sm:$0xff]
    %v615 = vld [vmem:[%s603 + $0x58] sm:$0xff]
    %v616 = vld [vmem:[%s603 + $0x60] sm:$0xff]
    %v617 = vld [vmem:[%s603 + $0x68] sm:$0xff]
    %v618 = vld [vmem:[%s603 + $0x70] sm:$0xff]
    %v619 = vld [vmem:[%s603 + $0x78] sm:$0xff]
    %v620 = vld [vmem:[#allocation2 + $0x6] sm:$0x1]
    %621 = vmatprep.subr.mxu0 0.0
    %622 = vmatpush1.msra.mxu0 %v604
    %623 = vmatprep.subr.mxu0 0.0
    %624 = vmatpush1.msra.mxu0 %v605
    %625 = vmatprep.subr.mxu0 0.0
    %626 = vmatpush1.msra.mxu0 %v606
    %627 = vmatprep.subr.mxu0 0.0
    %628 = vmatpush1.msra.mxu0 %v607
    %629 = vmatprep.subr.mxu0 0.0
    %630 = vmatpush1.msra.mxu0 %v608
    %631 = vmatprep.subr.mxu0 0.0
    %632 = vmatpush1.msra.mxu0 %v609
    %633 = vmatprep.subr.mxu0 0.0
    %634 = vmatpush1.msra.mxu0 %v610
    %635 = vmatprep.subr.mxu0 0.0
    %636 = vmatpush1.msra.mxu0 %v611
    %637 = vmatprep.subr.mxu0 0.0
    %638 = vmatpush1.msra.mxu0 %v612
    %639 = vmatprep.subr.mxu0 0.0
    %640 = vmatpush1.msra.mxu0 %v613
    %641 = vmatprep.subr.mxu0 0.0
    %642 = vmatpush1.msra.mxu0 %v614
    %643 = vmatprep.subr.mxu0 0.0
    %644 = vmatpush1.msra.mxu0 %v615
    %645 = vmatprep.subr.mxu0 0.0
    %646 = vmatpush1.msra.mxu0 %v616
    %647 = vmatprep.subr.mxu0 0.0
    %648 = vmatpush1.msra.mxu0 %v617
    %649 = vmatprep.subr.mxu0 0.0
    %650 = vmatpush1.msra.mxu0 %v618
    %651 = vmatprep.subr.mxu0 0.0
    %652 = vmatpush1.msra.mxu0 %v619
    %653 = vmatprep.subr.mxu0 0.0
    %654 = vmatpush1.msra.mxu0 0.0
    %655 = vmatprep.subr.mxu0 0.0
    %656 = vmatpush1.msra.mxu0 0.0
    %657 = vmatprep.subr.mxu0 0.0
    %658 = vmatpush1.msra.mxu0 0.0
    %659 = vmatprep.subr.mxu0 0.0
    %660 = vmatpush1.msra.mxu0 0.0
    %661 = vmatprep.subr.mxu0 0.0
    %662 = vmatpush1.msra.mxu0 0.0
    %663 = vmatprep.subr.mxu0 0.0
    %664 = vmatpush1.msra.mxu0 0.0
    %665 = vmatprep.subr.mxu0 0.0
    %666 = vmatpush1.msra.mxu0 0.0
    %667 = vmatprep.subr.mxu0 0.0
    %668 = vmatpush1.msra.mxu0 0.0
    %669 = vmatprep.subr.mxu0 0.0
    %670 = vmatpush1.msra.mxu0 0.0
    %671 = vmatprep.subr.mxu0 0.0
    %672 = vmatpush1.msra.mxu0 0.0
    %673 = vmatprep.subr.mxu0 0.0
    %674 = vmatpush1.msra.mxu0 0.0
    %675 = vmatprep.subr.mxu0 0.0
    %676 = vmatpush1.msra.mxu0 0.0
    %677 = vmatprep.subr.mxu0 0.0
    %678 = vmatpush1.msra.mxu0 0.0
    %679 = vmatprep.subr.mxu0 0.0
    %680 = vmatpush1.msra.mxu0 0.0
    %681 = vmatprep.subr.mxu0 0.0
    %682 = vmatpush1.msra.mxu0 0.0
    %683 = vmatprep.subr.mxu0 0.0
    %684 = vmatpush1.msra.mxu0 0.0
    %685 = vmatprep.mubr.f32.mxu0 0.0
    %686 = vmatmul.mubr.f32.gmra.mrb[0].mxu0 %v602
    %v687 = vpop.f32.mrb[0].mxu0
    %v688 = vadd.f32 0.0, %v687
    %v689 = vpop.f32.mrb[0].mxu0
    %690 = vdwg.mxu0
    %v691 = vadd.f32 %v620, %v688
    %692 = vst [vmem:[#allocation2 + $0x6] sm:$0x1] %v691
    %v693 = vld [vmem:[#allocation3 + $0x7] sm:$0x1]
    %s694 = scalar_lea.vmem [#allocation6], 896
    %v695 = vld [vmem:[%s694] sm:$0xff]
    %v696 = vld [vmem:[%s694 + $0x8] sm:$0xff]
    %v697 = vld [vmem:[%s694 + $0x10] sm:$0xff]
    %v698 = vld [vmem:[%s694 + $0x18] sm:$0xff]
    %v699 = vld [vmem:[%s694 + $0x20] sm:$0xff]
    %v700 = vld [vmem:[%s694 + $0x28] sm:$0xff]
    %v701 = vld [vmem:[%s694 + $0x30] sm:$0xff]
    %v702 = vld [vmem:[%s694 + $0x38] sm:$0xff]
    %v703 = vld [vmem:[%s694 + $0x40] sm:$0xff]
    %v704 = vld [vmem:[%s694 + $0x48] sm:$0xff]
    %v705 = vld [vmem:[%s694 + $0x50] sm:$0xff]
    %v706 = vld [vmem:[%s694 + $0x58] sm:$0xff]
    %v707 = vld [vmem:[%s694 + $0x60] sm:$0xff]
    %v708 = vld [vmem:[%s694 + $0x68] sm:$0xff]
    %v709 = vld [vmem:[%s694 + $0x70] sm:$0xff]
    %v710 = vld [vmem:[%s694 + $0x78] sm:$0xff]
    %v711 = vld [vmem:[#allocation2 + $0x7] sm:$0x1]
    %712 = vmatprep.subr.mxu0 0.0
    %713 = vmatpush1.msra.mxu0 %v695
    %714 = vmatprep.subr.mxu0 0.0
    %715 = vmatpush1.msra.mxu0 %v696
    %716 = vmatprep.subr.mxu0 0.0
    %717 = vmatpush1.msra.mxu0 %v697
    %718 = vmatprep.subr.mxu0 0.0
    %719 = vmatpush1.msra.mxu0 %v698
    %720 = vmatprep.subr.mxu0 0.0
    %721 = vmatpush1.msra.mxu0 %v699
    %722 = vmatprep.subr.mxu0 0.0
    %723 = vmatpush1.msra.mxu0 %v700
    %724 = vmatprep.subr.mxu0 0.0
    %725 = vmatpush1.msra.mxu0 %v701
    %726 = vmatprep.subr.mxu0 0.0
    %727 = vmatpush1.msra.mxu0 %v702
    %728 = vmatprep.subr.mxu0 0.0
    %729 = vmatpush1.msra.mxu0 %v703
    %730 = vmatprep.subr.mxu0 0.0
    %731 = vmatpush1.msra.mxu0 %v704
    %732 = vmatprep.subr.mxu0 0.0
    %733 = vmatpush1.msra.mxu0 %v705
    %734 = vmatprep.subr.mxu0 0.0
    %735 = vmatpush1.msra.mxu0 %v706
    %736 = vmatprep.subr.mxu0 0.0
    %737 = vmatpush1.msra.mxu0 %v707
    %738 = vmatprep.subr.mxu0 0.0
    %739 = vmatpush1.msra.mxu0 %v708
    %740 = vmatprep.subr.mxu0 0.0
    %741 = vmatpush1.msra.mxu0 %v709
    %742 = vmatprep.subr.mxu0 0.0
    %743 = vmatpush1.msra.mxu0 %v710
    %744 = vmatprep.subr.mxu0 0.0
    %745 = vmatpush1.msra.mxu0 0.0
    %746 = vmatprep.subr.mxu0 0.0
    %747 = vmatpush1.msra.mxu0 0.0
    %748 = vmatprep.subr.mxu0 0.0
    %749 = vmatpush1.msra.mxu0 0.0
    %750 = vmatprep.subr.mxu0 0.0
    %751 = vmatpush1.msra.mxu0 0.0
    %752 = vmatprep.subr.mxu0 0.0
    %753 = vmatpush1.msra.mxu0 0.0
    %754 = vmatprep.subr.mxu0 0.0
    %755 = vmatpush1.msra.mxu0 0.0
    %756 = vmatprep.subr.mxu0 0.0
    %757 = vmatpush1.msra.mxu0 0.0
    %758 = vmatprep.subr.mxu0 0.0
    %759 = vmatpush1.msra.mxu0 0.0
    %760 = vmatprep.subr.mxu0 0.0
    %761 = vmatpush1.msra.mxu0 0.0
    %762 = vmatprep.subr.mxu0 0.0
    %763 = vmatpush1.msra.mxu0 0.0
    %764 = vmatprep.subr.mxu0 0.0
    %765 = vmatpush1.msra.mxu0 0.0
    %766 = vmatprep.subr.mxu0 0.0
    %767 = vmatpush1.msra.mxu0 0.0
    %768 = vmatprep.subr.mxu0 0.0
    %769 = vmatpush1.msra.mxu0 0.0
    %770 = vmatprep.subr.mxu0 0.0
    %771 = vmatpush1.msra.mxu0 0.0
    %772 = vmatprep.subr.mxu0 0.0
    %773 = vmatpush1.msra.mxu0 0.0
    %774 = vmatprep.subr.mxu0 0.0
    %775 = vmatpush1.msra.mxu0 0.0
    %776 = vmatprep.mubr.f32.mxu0 0.0
    %777 = vmatmul.mubr.f32.gmra.mrb[0].mxu0 %v693
    %v778 = vpop.f32.mrb[0].mxu0
    %v779 = vadd.f32 0.0, %v778
    %v780 = vpop.f32.mrb[0].mxu0
    %781 = vdwg.mxu0
    %v782 = vadd.f32 %v711, %v779
    %783 = vst [vmem:[#allocation2 + $0x7] sm:$0x1] %v782
    // Predicated region
    $region30: #{tpu_custom_call.1} parent=1 // pred_check
      %p784 = pneg %p52
    $region31: #{tpu_custom_call.1} parent=1 // pred_check_branch
      %786 = sbr.rel (%p784) target = $region33
    $region32: #{tpu_custom_call.1} parent=1 // pred_region
      %v787 = vld [vmem:[#allocation2] sm:$0xff]
      %v788 = vld [vmem:[#allocation8] sm:$0xff]
      %v789 = vadd.f32 %v787, %v788
      %790 = vst [vmem:[#allocation9] sm:$0xff] %v789
    $region33: #{tpu_custom_call.1} parent=1 // pred_fallthru
      _
    // Predicated region
    $region34: #{tpu_custom_call.1} parent=1 // pred_check
      _
    $region35: #{tpu_custom_call.1} parent=1 // pred_check_branch
      %792 = sbr.rel (0) target = $region37
    $region36: #{tpu_custom_call.1} parent=1 // pred_region
      %s794 = ssub.s32 128, 128
      %795 = vsyncadd [#allocation5], %s794
      %s797 = sshll.u32 [#allocation9], 4
      %s798 = int_to_ptr.vmem [resolvable:$true] %s797
      %800 = dma.vmem_to_hbm [thread:$0]  %s798, 128, %s3, [#allocation5]
    $region37: #{tpu_custom_call.1} parent=1 // pred_fallthru
      _
    // Predicated region
    $region38: #{tpu_custom_call.1} parent=1 // pred_check
      _
    $region39: #{tpu_custom_call.1} parent=1 // pred_check_branch
      %802 = sbr.rel (0) target = $region41
    $region40: #{tpu_custom_call.1} parent=1 // pred_region
      %803 = dma.done [#allocation5], 128
    $region41: #{tpu_custom_call.1} parent=1 // pred_fallthru
      _
    %804 = vsyncpa [#allocation4], 1
    %805 = vsyncpa [#allocation7], 1
    %806 = vsyncpa [#allocation5], 1

</llo_original>
